<compile_context>
chip_gen: v5e
topology: v5e:2x2
jax: 0.10.0
libtpu: 0.0.40
codegen_flags: <defaults>
</compile_context>

<pallas_src>
import functools

import jax
import jax.numpy as jnp
from jax.experimental import pallas as pl
from jax.experimental.pallas import tpu as pltpu


def _round_up(n, m):
    return ((n + m - 1) // m) * m


def ddpg_critic_kernel(x_ref, w_bd_ref, b1_ref, w2a_ref, b2_ref, w3_ref, b3_ref,
                       out_ref, *, hidden1):
    # x is the concatenated [obs | act] activation tile, shape (tb, obs+act).
    x = x_ref[...].astype(w_bd_ref.dtype)   # no-op when the wrapper already cast

    # Fused layer-1 / act-branch matmul against the block-diagonal weight:
    #   [obs|act] @ [[W1,0],[0,W2b]] = [obs@W1 | act@W2b]   (tb, hidden1+hidden2)
    y = jnp.dot(x, w_bd_ref[...], preferred_element_type=jnp.float32)

    # Layer 1: bias + ReLU on the first hidden1 columns (lane-tile-aligned slice).
    h1 = jnp.maximum(y[:, :hidden1] + b1_ref[...], 0.0)
    h1 = h1.astype(w2a_ref.dtype)            # feed layer 2 in the matmul dtype
    act_contrib = y[:, hidden1:]              # act @ W2b, already f32

    # Layer 2: Linear(hidden1 + act_size -> hidden2) + ReLU (concat fused away).
    h2 = jnp.dot(h1, w2a_ref[...], preferred_element_type=jnp.float32)
    h2 = jnp.maximum(h2 + act_contrib + b2_ref[...], 0.0)

    # Layer 3: Linear(hidden2 -> 1) as VPU multiply + XLU lane reduction.
    out = jnp.sum(h2 * w3_ref[...], axis=-1, keepdims=True)
    out_ref[...] = out + b3_ref[...]


def ddpg_critic_forward(obs, action, params, *, tile_b=2048):
    """obs: (B, obs_size), action: (B, act_size) -> (B, 1) float32."""
    B, obs_size = obs.shape
    act_size = action.shape[1]

    w_bd, w2a = params["w_bd"], params["w2a"]
    b1, b2 = params["b1"], params["b2"]
    w3_row, b3 = params["w3_row"], params["b3"]

    in_dim = w_bd.shape[0]
    hidden1, hidden2 = w2a.shape
    assert in_dim == obs_size + act_size

    # One lane-packed activation operand; the bf16 cast (if any) fuses into the
    # same producer op as the concat -> no standalone convert pass over HBM.
    # (Best case: the caller produces this concatenated bf16 array upstream.)
    compute_dtype = w_bd.dtype
    x = jnp.concatenate([obs, action], axis=1).astype(compute_dtype)

    # Batch tiling: biggest tile that amortises per-step overhead, floored to a
    # multiple of 8, but capped so there are >= 2 grid steps once B >= 16 (both
    # v7x TensorCores get work).  No HBM padding: trailing block is masked.
    if B <= 8:
        tb = B
    else:
        b8 = _round_up(B, 8)
        tb = min(tile_b, b8)
        if b8 >= 16:
            tb = min(tb, _round_up(pl.cdiv(b8, 2), 8))
        tb = max(8, (tb // 8) * 8)
    num_tiles = pl.cdiv(B, tb)

    batch_map = lambda i: (i, 0)
    const_map = lambda i: (0, 0)   # weights/biases stay VMEM-resident

    elem = w_bd.dtype.itemsize
    flops = 2 * B * (in_dim * (hidden1 + hidden2) + hidden1 * hidden2 + hidden2)
    weight_bytes = (elem * (w_bd.size + w2a.size)
                    + 4 * (b1.size + b2.size + w3_row.size + b3.size))
    bytes_accessed = elem * B * in_dim + 4 * B + weight_bytes

    kernel = functools.partial(ddpg_critic_kernel, hidden1=hidden1)

    out = pl.pallas_call(
        kernel,
        out_shape=jax.ShapeDtypeStruct((B, 1), jnp.float32),
        grid=(num_tiles,),
        in_specs=[
            pl.BlockSpec((tb, in_dim), batch_map),                     # [obs|act]
            pl.BlockSpec((in_dim, hidden1 + hidden2), const_map),      # block-diag W
            pl.BlockSpec((1, hidden1), const_map),                     # b1
            pl.BlockSpec((hidden1, hidden2), const_map),               # W2a
            pl.BlockSpec((1, hidden2), const_map),                     # b2
            pl.BlockSpec((1, hidden2), const_map),                     # w3 row
            pl.BlockSpec((1, 1), const_map),                           # b3
        ],
        out_specs=pl.BlockSpec((tb, 1), batch_map),
        compiler_params=pltpu.CompilerParams(
            dimension_semantics=("parallel",)),
        cost_estimate=pl.CostEstimate(
            flops=int(flops), transcendentals=0, bytes_accessed=int(bytes_accessed)),
    )(x, w_bd, b1, w2a, b2, w3_row, b3)
    return out


def init_params(key, obs_size, act_size, hidden1=128, hidden2=128):
    """PyTorch nn.Linear-style init: U(-1/sqrt(fan_in), 1/sqrt(fan_in)).

    Returns float32 weights in (in_features, out_features) layout.
    """
    ks = jax.random.split(key, 6)

    def u(k, shape, fan_in):
        bound = 1.0 / (fan_in ** 0.5)
        return jax.random.uniform(k, shape, jnp.float32, -bound, bound)

    w1 = u(ks[0], (obs_size, hidden1), obs_size)
    b1 = u(ks[1], (1, hidden1), obs_size)
    fan2 = hidden1 + act_size
    w2 = u(ks[2], (fan2, hidden2), fan2)
    b2 = u(ks[3], (1, hidden2), fan2)
    w3 = u(ks[4], (hidden2, 1), hidden2)
    b3 = u(ks[5], (1, 1), hidden2)
    return (w1, b1, w2, b2, w3, b3)


def pack_params(raw, obs_size, hidden1, compute_dtype=jnp.bfloat16):
    """Pack raw weights for the kernel: block-diagonal [[W1,0],[0,W2b]] plus W2a.

    Matmul weights are stored in `compute_dtype` (bf16 by default); biases and
    the layer-3 row stay f32 (f32 accumulation / epilogue in-kernel).
    """
    w1, b1, w2, b2, w3, b3 = raw
    fan2, hidden2 = w2.shape
    act_size = fan2 - hidden1

    w_bd = jnp.zeros((obs_size + act_size, hidden1 + hidden2), jnp.float32)
    w_bd = w_bd.at[:obs_size, :hidden1].set(w1)
    w_bd = w_bd.at[obs_size:, hidden1:].set(w2[hidden1:, :])

    return dict(
        w_bd=w_bd.astype(compute_dtype),
        w2a=w2[:hidden1, :].astype(compute_dtype),
        b1=b1.astype(jnp.float32),
        b2=b2.astype(jnp.float32),
        w3_row=w3.T.astype(jnp.float32),
        b3=b3.astype(jnp.float32),
    )


def reference_forward(obs, action, raw):
    """Pure-JAX f32 reference matching the PyTorch module exactly."""
    w1, b1, w2, b2, w3, b3 = raw
    h1 = jnp.maximum(obs @ w1 + b1, 0.0)
    h2 = jnp.maximum(jnp.concatenate([h1, action], axis=1) @ w2 + b2, 0.0)
    return h2 @ w3 + b3


if __name__ == "__main__":
    obs_size, act_size = 32, 8
    hidden1, hidden2 = 128, 128
    batch = 20  # deliberately not a multiple of 8: exercises trailing-block masking

    key = jax.random.PRNGKey(0)
    k_obs, k_act, k_par, k_o2, k_a2 = jax.random.split(key, 5)

    obs = jax.random.normal(k_obs, (batch, obs_size), jnp.float32)
    action = jax.random.normal(k_act, (batch, act_size), jnp.float32)

    raw = init_params(k_par, obs_size, act_size, hidden1, hidden2)
    ref = reference_forward(obs, action, raw)

    # 1) Exact f32 path (B=20 -> tb=16, 2 grid steps, masked ragged tail).
    p_f32 = pack_params(raw, obs_size, hidden1, compute_dtype=jnp.float32)
    out_f32 = jax.block_until_ready(ddpg_critic_forward(obs, action, p_f32))
    assert out_f32.shape == (batch, 1)
    assert jnp.allclose(out_f32, ref, atol=1e-4, rtol=1e-4), "f32 mismatch vs reference"

    # 2) Default bf16 matmul-operand path (f32 accumulation) -- loose tolerance.
    p_bf16 = pack_params(raw, obs_size, hidden1)  # bf16 default
    out_bf16 = jax.block_until_ready(ddpg_critic_forward(obs, action, p_bf16))
    assert out_bf16.shape == (batch, 1)
    assert jnp.allclose(out_bf16, ref, atol=5e-2, rtol=5e-2), "bf16 mismatch vs reference"

    # 3) Larger batch: exercises the multi-tile "parallel" path (B=512 -> tb=256, 2 steps).
    B2 = 512
    obs2 = jax.random.normal(k_o2, (B2, obs_size), jnp.float32)
    act2 = jax.random.normal(k_a2, (B2, act_size), jnp.float32)
    ref2 = reference_forward(obs2, act2, raw)
    out2 = jax.block_until_ready(ddpg_critic_forward(obs2, act2, p_f32))
    assert out2.shape == (B2, 1)
    assert jnp.allclose(out2, ref2, atol=1e-4, rtol=1e-4), "large-batch mismatch vs reference"

    print("KERNEL_OK")
</pallas_src>

<mosaic_0001>
module attributes {stable_mosaic.version = 11 : i64} {
  func.func @ddpg_critic_kernel(%arg0: i32, %arg1: memref<16x40xf32, #tpu.memory_space<vmem>>, %arg2: memref<40x256xf32, #tpu.memory_space<vmem>>, %arg3: memref<1x128xf32, #tpu.memory_space<vmem>>, %arg4: memref<128x128xf32, #tpu.memory_space<vmem>>, %arg5: memref<1x128xf32, #tpu.memory_space<vmem>>, %arg6: memref<1x128xf32, #tpu.memory_space<vmem>>, %arg7: memref<1x1xf32, #tpu.memory_space<vmem>>, %arg8: memref<16x1xf32, #tpu.memory_space<vmem>>) attributes {dimension_semantics = [#tpu.dimension_semantics<parallel>], iteration_bounds = array<i64: 2>, scalar_prefetch = 0 : i64, scratch_operands = 0 : i64, tpu.core_type = #tpu.core_type<tc>, window_params = [{transform_indices = @transform_0, window_bounds = array<i64: 16, 40>}, {pipeline_mode = #tpu.pipeline_mode<synchronous>, transform_indices = @transform_1, window_bounds = array<i64: 40, 256>}, {pipeline_mode = #tpu.pipeline_mode<synchronous>, transform_indices = @transform_2, window_bounds = array<i64: 1, 128>}, {pipeline_mode = #tpu.pipeline_mode<synchronous>, transform_indices = @transform_3, window_bounds = array<i64: 128, 128>}, {pipeline_mode = #tpu.pipeline_mode<synchronous>, transform_indices = @transform_4, window_bounds = array<i64: 1, 128>}, {pipeline_mode = #tpu.pipeline_mode<synchronous>, transform_indices = @transform_5, window_bounds = array<i64: 1, 128>}, {pipeline_mode = #tpu.pipeline_mode<synchronous>, transform_indices = @transform_6, window_bounds = array<i64: 1, 1>}, {transform_indices = @transform_7, window_bounds = array<i64: 16, 1>}]} {
    %c0 = arith.constant 0 : index
    %c0_0 = arith.constant 0 : index
    %0 = vector.load %arg1[%c0, %c0_0] : memref<16x40xf32, #tpu.memory_space<vmem>>, vector<16x40xf32>
    %c0_1 = arith.constant 0 : index
    %c0_2 = arith.constant 0 : index
    %1 = vector.load %arg2[%c0_1, %c0_2] : memref<40x256xf32, #tpu.memory_space<vmem>>, vector<40x256xf32>
    %cst = arith.constant dense<0.000000e+00> : vector<16x256xf32>
    %2 = tpu.matmul %0, %1, %cst {dimension_numbers = #tpu.dot_dimension_numbers<[1], [0], [0], [1], [0, 0, 1, 1], [], []>} : vector<16x40xf32>, vector<40x256xf32>, vector<16x256xf32> -> vector<16x256xf32>
    %3 = vector.extract_strided_slice %2 {offsets = [0, 0], sizes = [16, 128], strides = [1, 1]} : vector<16x256xf32> to vector<16x128xf32>
    %c0_3 = arith.constant 0 : index
    %c0_4 = arith.constant 0 : index
    %4 = vector.load %arg3[%c0_3, %c0_4] : memref<1x128xf32, #tpu.memory_space<vmem>>, vector<1x128xf32>
    %5 = vector.broadcast %4 : vector<1x128xf32> to vector<16x128xf32>
    %6 = arith.addf %3, %5 : vector<16x128xf32>
    %cst_5 = arith.constant 0.000000e+00 : f32
    %7 = vector.broadcast %cst_5 : f32 to vector<16x128xf32>
    %8 = arith.maximumf %6, %7 : vector<16x128xf32>
    %9 = vector.extract_strided_slice %2 {offsets = [0, 128], sizes = [16, 128], strides = [1, 1]} : vector<16x256xf32> to vector<16x128xf32>
    %c0_6 = arith.constant 0 : index
    %c0_7 = arith.constant 0 : index
    %10 = vector.load %arg4[%c0_6, %c0_7] : memref<128x128xf32, #tpu.memory_space<vmem>>, vector<128x128xf32>
    %cst_8 = arith.constant dense<0.000000e+00> : vector<16x128xf32>
    %11 = tpu.matmul %8, %10, %cst_8 {dimension_numbers = #tpu.dot_dimension_numbers<[1], [0], [0], [1], [0, 0, 1, 1], [], []>} : vector<16x128xf32>, vector<128x128xf32>, vector<16x128xf32> -> vector<16x128xf32>
    %12 = arith.addf %11, %9 : vector<16x128xf32>
    %c0_9 = arith.constant 0 : index
    %c0_10 = arith.constant 0 : index
    %13 = vector.load %arg5[%c0_9, %c0_10] : memref<1x128xf32, #tpu.memory_space<vmem>>, vector<1x128xf32>
    %14 = vector.broadcast %13 : vector<1x128xf32> to vector<16x128xf32>
    %15 = arith.addf %12, %14 : vector<16x128xf32>
    %cst_11 = arith.constant 0.000000e+00 : f32
    %16 = vector.broadcast %cst_11 : f32 to vector<16x128xf32>
    %17 = arith.maximumf %15, %16 : vector<16x128xf32>
    %c0_12 = arith.constant 0 : index
    %c0_13 = arith.constant 0 : index
    %18 = vector.load %arg6[%c0_12, %c0_13] : memref<1x128xf32, #tpu.memory_space<vmem>>, vector<1x128xf32>
    %19 = vector.broadcast %18 : vector<1x128xf32> to vector<16x128xf32>
    %20 = arith.mulf %17, %19 : vector<16x128xf32>
    %cst_14 = arith.constant dense<0.000000e+00> : vector<16xf32>
    %21 = vector.multi_reduction <add>, %20, %cst_14 [1] : vector<16x128xf32> to vector<16xf32>
    %22 = vector.shape_cast %21 : vector<16xf32> to vector<16x1xf32>
    %c0_15 = arith.constant 0 : index
    %c0_16 = arith.constant 0 : index
    %23 = vector.load %arg7[%c0_15, %c0_16] : memref<1x1xf32, #tpu.memory_space<vmem>>, vector<1x1xf32>
    %24 = vector.broadcast %23 : vector<1x1xf32> to vector<16x1xf32>
    %25 = arith.addf %22, %24 : vector<16x1xf32>
    %c0_17 = arith.constant 0 : index
    %c0_18 = arith.constant 0 : index
    %26 = vector.load %arg8[%c0_17, %c0_18] : memref<16x1xf32, #tpu.memory_space<vmem>>, vector<16x1xf32>
    tpu.vector_store %arg8[%c0_17, %c0_18], %25 {strides = array<i32>} : memref<16x1xf32, #tpu.memory_space<vmem>>, vector<16x1xf32>,
    return
  }
  func.func @transform_0(%arg0: i32) -> (i32, i32) {
    %c0_i32 = arith.constant 0 : i32
    %c0_i32_0 = arith.constant 0 : i32
    return %arg0, %c0_i32 : i32, i32
  }
  func.func @transform_1(%arg0: i32) -> (i32, i32) {
    %c0_i32 = arith.constant 0 : i32
    %c0_i32_0 = arith.constant 0 : i32
    %c0_i32_1 = arith.constant 0 : i32
    return %c0_i32, %c0_i32_0 : i32, i32
  }
  func.func @transform_2(%arg0: i32) -> (i32, i32) {
    %c0_i32 = arith.constant 0 : i32
    %c0_i32_0 = arith.constant 0 : i32
    %c0_i32_1 = arith.constant 0 : i32
    return %c0_i32, %c0_i32_0 : i32, i32
  }
  func.func @transform_3(%arg0: i32) -> (i32, i32) {
    %c0_i32 = arith.constant 0 : i32
    %c0_i32_0 = arith.constant 0 : i32
    %c0_i32_1 = arith.constant 0 : i32
    return %c0_i32, %c0_i32_0 : i32, i32
  }
  func.func @transform_4(%arg0: i32) -> (i32, i32) {
    %c0_i32 = arith.constant 0 : i32
    %c0_i32_0 = arith.constant 0 : i32
    %c0_i32_1 = arith.constant 0 : i32
    return %c0_i32, %c0_i32_0 : i32, i32
  }
  func.func @transform_5(%arg0: i32) -> (i32, i32) {
    %c0_i32 = arith.constant 0 : i32
    %c0_i32_0 = arith.constant 0 : i32
    %c0_i32_1 = arith.constant 0 : i32
    return %c0_i32, %c0_i32_0 : i32, i32
  }
  func.func @transform_6(%arg0: i32) -> (i32, i32) {
    %c0_i32 = arith.constant 0 : i32
    %c0_i32_0 = arith.constant 0 : i32
    %c0_i32_1 = arith.constant 0 : i32
    return %c0_i32, %c0_i32_0 : i32, i32
  }
  func.func @transform_7(%arg0: i32) -> (i32, i32) {
    %c0_i32 = arith.constant 0 : i32
    %c0_i32_0 = arith.constant 0 : i32
    return %arg0, %c0_i32 : i32, i32
  }
}

</mosaic_0001>

<llo_original>
// kernel: tpu_custom_call.1
$region0: #{tpu_custom_call.1}
  #allocation0 [shape = 'u32[]', space=smem, size = 0x4, offset = 0x4, fixed_abs, tag = 'smem constant byte address 0x4 - core index']
  #allocation1 [shape = 'u32[72,128]{1,0:T(1,128)}', space=vmem, size = 0x9000, scoped, tag = 'internal scratch']
  #allocation2 [shape = 'f32[1,1]{1,0:T(1,128)S(1)}', space=vmem, size = 0x200, scoped, tag = 'scoped memory for tpu_custom_call.1']
  %s0 = inlined_call_operand.hbm [shape: f32[20,40], index: 0, kind: input, shape index: {}]
  %s1 = inlined_call_operand.hbm [shape: f32[40,256], index: 1, kind: input, shape index: {}]
  %s2 = inlined_call_operand.vmem [shape: f32[1,128], index: 2, kind: input, shape index: {}]
  %s3 = inlined_call_operand.hbm [shape: f32[128,128], index: 3, kind: input, shape index: {}]
  %s4 = inlined_call_operand.vmem [shape: f32[1,128], index: 4, kind: input, shape index: {}]
  %s5 = inlined_call_operand.vmem [shape: f32[1,128], index: 5, kind: input, shape index: {}]
  %s6 = inlined_call_operand.<no memory space> [shape: f32[1,1], index: 6, kind: input, shape index: {}]
  %s7 = inlined_call_operand.vmem [shape: f32[20,1], index: 7, kind: output, shape index: {}]
  %s8 = sld [smem:[#allocation0]]
  $region121: #{tpu_custom_call.1} parent=0
    _
  %s10 = ssub.s32 1, %s8
  %s11 = scalar_select 0, %s10, %s8
  %v12 = vstv %s6
  %13 = vst [vmem:[#allocation2] sm:$0x1] %v12
  $region1: #{tpu_custom_call.1} parent=0
    #allocation3 [shape = 'u8[16384]{0}', space=vmem, size = 0x4000, scoped, tag = 'input window, operand 0']
    #allocation4 [shape = 's32[2]{0}', space=sflag, size = 0x8, scoped, tag = 'scoped memory for tpu_custom_call.1']
    #allocation5 [shape = 'u8[40960]{0}', space=vmem, size = 0xa000, scoped, tag = 'input window, operand 1, single buffered']
    #allocation6 [shape = 's32[1]{0}', space=sflag, size = 0x4, scoped, tag = 'scoped memory for tpu_custom_call.1']
    #allocation7 [shape = 'u8[65536]{0}', space=vmem, size = 0x10000, scoped, tag = 'input window, operand 3, single buffered']
    #allocation8 [shape = 'u8[16384]{0}', space=vmem, size = 0x4000, scoped, tag = 'output window, operand 0']
    %14 = vsyncpa [#allocation4], 0
    %s15 = scalar_lea.sflag [#allocation4], 1
    %16 = vsyncpa %s15, 0
    %17 = vsyncpa [#allocation6], 0
    loop: start=0, step=1, limit=4
    $region2: #{tpu_custom_call.1} parent=1 // loop_pre_header
      _
    $region3: #{tpu_custom_call.1} parent=1 // loop_header
      %s19 = sphi 0, %s23
      %p20 = scmp.ge.s32.totalorder %s19, 4
      %s29 = sphi 0, %s31
      %s32 = sphi 0, %s29
      %s33 = sphi 0, %s32
      %s49 = sphi 0, %s33
      %s53 = sphi 0, %s53
      %s55 = sphi 0, %s53
      %s56 = sphi 0, %s55
      %s70 = sphi 0, %s56
      %s74 = sphi 0, %s74
      %s76 = sphi 0, %s74
      %s77 = sphi 0, %s76
      %s91 = sphi 0, %s77
      %s95 = sphi 0, %s95
      %s97 = sphi 0, %s95
      %s98 = sphi 0, %s97
      %s112 = sphi 0, %s98
      %s116 = sphi 0, %s116
      %s118 = sphi 0, %s116
      %s119 = sphi 0, %s118
      %s133 = sphi 0, %s119
      %s137 = sphi 0, %s137
      %s139 = sphi 0, %s137
      %s140 = sphi 0, %s139
      %s154 = sphi 0, %s140
      %s158 = sphi 0, %s158
      %s160 = sphi 0, %s158
      %s161 = sphi 0, %s160
      %s175 = sphi 0, %s161
      %s181 = sphi 0, %s183
      %s184 = sphi 0, %s181
      %s185 = sphi 0, %s184
      %s201 = sphi 0, %s185
    $region4: #{tpu_custom_call.1} parent=1 // loop_header_branch
      %22 = sbr.rel (%p20) target = $region8
    $region5: #{tpu_custom_call.1} parent=1 // loop_body
      %s24 = ssub.s32 %s19, 1
      %s25 = ssub.s32 %s19, 2
      %s26 = sadd.s32 %s19, 1
      %s27 = ssub.s32 %s19, %s26
      %p28 = scmp.eq.s32.totalorder %s27, 0
      %s30 = sadd.s32 %s29, 1
      %s31 = scalar_select %p28, %s29, %s30
      %p34 = pneg %p28
      %p35 = scmp.eq.s32.totalorder %s19, 1
      %p36 = por %p34, %p35
      %p37 = scmp.ne.s32.totalorder %s29, %s32
      %p38 = scmp.eq.s32.totalorder %s19, 0
      %p39 = por %p37, %p38
      %p40 = scmp.ne.s32.totalorder %s29, %s32
      %p41 = scmp.eq.s32.totalorder %s24, 1
      %p42 = por %p40, %p41
      %p43 = scmp.ne.s32.totalorder %s32, %s33
      %p44 = scmp.eq.s32.totalorder %s24, 0
      %p45 = por %p43, %p44
      %p46 = scmp.ne.s32.totalorder %s32, %s33
      %p47 = scmp.eq.s32.totalorder %s25, 1
      %p48 = por %p46, %p47
      %p50 = scmp.ne.s32.totalorder %s33, %s49
      %p51 = scmp.eq.s32.totalorder %s25, 0
      %p52 = por %p50, %p51
      %s54 = sadd.s32 %s53, 1
      %p57 = scmp.eq.s32.totalorder %s19, 1
      %p58 = scmp.ne.s32.totalorder %s53, %s55
      %p59 = scmp.eq.s32.totalorder %s19, 0
      %p60 = por %p58, %p59
      %p61 = scmp.ne.s32.totalorder %s53, %s55
      %p62 = scmp.eq.s32.totalorder %s24, 1
      %p63 = por %p61, %p62
      %p64 = scmp.ne.s32.totalorder %s55, %s56
      %p65 = scmp.eq.s32.totalorder %s24, 0
      %p66 = por %p64, %p65
      %p67 = scmp.ne.s32.totalorder %s55, %s56
      %p68 = scmp.eq.s32.totalorder %s25, 1
      %p69 = por %p67, %p68
      %p71 = scmp.ne.s32.totalorder %s56, %s70
      %p72 = scmp.eq.s32.totalorder %s25, 0
      %p73 = por %p71, %p72
      %s75 = sadd.s32 %s74, 1
      %p78 = scmp.eq.s32.totalorder %s19, 1
      %p79 = scmp.ne.s32.totalorder %s74, %s76
      %p80 = scmp.eq.s32.totalorder %s19, 0
      %p81 = por %p79, %p80
      %p82 = scmp.ne.s32.totalorder %s74, %s76
      %p83 = scmp.eq.s32.totalorder %s24, 1
      %p84 = por %p82, %p83
      %p85 = scmp.ne.s32.totalorder %s76, %s77
      %p86 = scmp.eq.s32.totalorder %s24, 0
      %p87 = por %p85, %p86
      %p88 = scmp.ne.s32.totalorder %s76, %s77
      %p89 = scmp.eq.s32.totalorder %s25, 1
      %p90 = por %p88, %p89
      %p92 = scmp.ne.s32.totalorder %s77, %s91
      %p93 = scmp.eq.s32.totalorder %s25, 0
      %p94 = por %p92, %p93
      %s96 = sadd.s32 %s95, 1
      %p99 = scmp.eq.s32.totalorder %s19, 1
      %p100 = scmp.ne.s32.totalorder %s95, %s97
      %p101 = scmp.eq.s32.totalorder %s19, 0
      %p102 = por %p100, %p101
      %p103 = scmp.ne.s32.totalorder %s95, %s97
      %p104 = scmp.eq.s32.totalorder %s24, 1
      %p105 = por %p103, %p104
      %p106 = scmp.ne.s32.totalorder %s97, %s98
      %p107 = scmp.eq.s32.totalorder %s24, 0
      %p108 = por %p106, %p107
      %p109 = scmp.ne.s32.totalorder %s97, %s98
      %p110 = scmp.eq.s32.totalorder %s25, 1
      %p111 = por %p109, %p110
      %p113 = scmp.ne.s32.totalorder %s98, %s112
      %p114 = scmp.eq.s32.totalorder %s25, 0
      %p115 = por %p113, %p114
      %s117 = sadd.s32 %s116, 1
      %p120 = scmp.eq.s32.totalorder %s19, 1
      %p121 = scmp.ne.s32.totalorder %s116, %s118
      %p122 = scmp.eq.s32.totalorder %s19, 0
      %p123 = por %p121, %p122
      %p124 = scmp.ne.s32.totalorder %s116, %s118
      %p125 = scmp.eq.s32.totalorder %s24, 1
      %p126 = por %p124, %p125
      %p127 = scmp.ne.s32.totalorder %s118, %s119
      %p128 = scmp.eq.s32.totalorder %s24, 0
      %p129 = por %p127, %p128
      %p130 = scmp.ne.s32.totalorder %s118, %s119
      %p131 = scmp.eq.s32.totalorder %s25, 1
      %p132 = por %p130, %p131
      %p134 = scmp.ne.s32.totalorder %s119, %s133
      %p135 = scmp.eq.s32.totalorder %s25, 0
      %p136 = por %p134, %p135
      %s138 = sadd.s32 %s137, 1
      %p141 = scmp.eq.s32.totalorder %s19, 1
      %p142 = scmp.ne.s32.totalorder %s137, %s139
      %p143 = scmp.eq.s32.totalorder %s19, 0
      %p144 = por %p142, %p143
      %p145 = scmp.ne.s32.totalorder %s137, %s139
      %p146 = scmp.eq.s32.totalorder %s24, 1
      %p147 = por %p145, %p146
      %p148 = scmp.ne.s32.totalorder %s139, %s140
      %p149 = scmp.eq.s32.totalorder %s24, 0
      %p150 = por %p148, %p149
      %p151 = scmp.ne.s32.totalorder %s139, %s140
      %p152 = scmp.eq.s32.totalorder %s25, 1
      %p153 = por %p151, %p152
      %p155 = scmp.ne.s32.totalorder %s140, %s154
      %p156 = scmp.eq.s32.totalorder %s25, 0
      %p157 = por %p155, %p156
      %s159 = sadd.s32 %s158, 1
      %p162 = scmp.eq.s32.totalorder %s19, 1
      %p163 = scmp.ne.s32.totalorder %s158, %s160
      %p164 = scmp.eq.s32.totalorder %s19, 0
      %p165 = por %p163, %p164
      %p166 = scmp.ne.s32.totalorder %s158, %s160
      %p167 = scmp.eq.s32.totalorder %s24, 1
      %p168 = por %p166, %p167
      %p169 = scmp.ne.s32.totalorder %s160, %s161
      %p170 = scmp.eq.s32.totalorder %s24, 0
      %p171 = por %p169, %p170
      %p172 = scmp.ne.s32.totalorder %s160, %s161
      %p173 = scmp.eq.s32.totalorder %s25, 1
      %p174 = por %p172, %p173
      %p176 = scmp.ne.s32.totalorder %s161, %s175
      %p177 = scmp.eq.s32.totalorder %s25, 0
      %p178 = por %p176, %p177
      %s179 = ssub.s32 %s19, %s26
      %p180 = scmp.eq.s32.totalorder %s179, 0
      %s182 = sadd.s32 %s181, 1
      %s183 = scalar_select %p180, %s181, %s182
      %p186 = pneg %p180
      %p187 = scmp.eq.s32.totalorder %s19, 1
      %p188 = por %p186, %p187
      %p189 = scmp.ne.s32.totalorder %s181, %s184
      %p190 = scmp.eq.s32.totalorder %s19, 0
      %p191 = por %p189, %p190
      %p192 = scmp.ne.s32.totalorder %s181, %s184
      %p193 = scmp.eq.s32.totalorder %s24, 1
      %p194 = por %p192, %p193
      %p195 = scmp.ne.s32.totalorder %s184, %s185
      %p196 = scmp.eq.s32.totalorder %s24, 0
      %p197 = por %p195, %p196
      %p198 = scmp.ne.s32.totalorder %s184, %s185
      %p199 = scmp.eq.s32.totalorder %s25, 1
      %p200 = por %p198, %p199
      %p202 = scmp.ne.s32.totalorder %s185, %s201
      %p203 = scmp.eq.s32.totalorder %s25, 0
      %p204 = por %p202, %p203
      %p205 = scmp.le.s32.totalorder 1, %s19
      %p206 = scmp.lt.s32.totalorder %s19, 3
      %p207 = pnand %p205, %p206
      %p208 = pneg %p207
      // Predicated region
      $region9: #{tpu_custom_call.1} parent=5 // pred_check
        _
      $region10: #{tpu_custom_call.1} parent=5 // pred_check_branch
        %210 = sbr.rel (%p207) target = $region12
      $region11: #{tpu_custom_call.1} parent=5 // pred_region
        %s211 = ssub.s32 %s19, 1
        // Predicated region
        $region13: #{tpu_custom_call.1} parent=11 // pred_check
          %p212 = pneg %p66
        $region14: #{tpu_custom_call.1} parent=11 // pred_check_branch
          %214 = sbr.rel (%p212) target = $region16
        $region15: #{tpu_custom_call.1} parent=11 // pred_region
          %216 = vsyncadd [#allocation6], 0
          %s217 = sshll.u32 %s1, 4
          %s218 = int_to_ptr.hbm [resolvable:$true] %s217
          %s219 = sshll.u32 [#allocation5], 4
          %s220 = int_to_ptr.vmem [resolvable:$true] %s219
          %225 = dma.hbm_to_vmem [thread:$0]  %s218, 1280, %s220, [#allocation6], 256, 256, 16
        $region16: #{tpu_custom_call.1} parent=11 // pred_fallthru
          _
        // Predicated region
        $region17: #{tpu_custom_call.1} parent=11 // pred_check
          %p226 = pneg %p87
        $region18: #{tpu_custom_call.1} parent=11 // pred_check_branch
          %228 = sbr.rel (%p226) target = $region20
        $region19: #{tpu_custom_call.1} parent=11 // pred_region
          _
        $region20: #{tpu_custom_call.1} parent=11 // pred_fallthru
          _
        // Predicated region
        $region21: #{tpu_custom_call.1} parent=11 // pred_check
          %p229 = pneg %p108
        $region22: #{tpu_custom_call.1} parent=11 // pred_check_branch
          %231 = sbr.rel (%p229) target = $region24
        $region23: #{tpu_custom_call.1} parent=11 // pred_region
          %233 = vsyncadd [#allocation6], 0
          %s234 = sshll.u32 %s3, 4
          %s235 = int_to_ptr.hbm [resolvable:$true] %s234
          %s236 = sshll.u32 [#allocation7], 4
          %s237 = int_to_ptr.vmem [resolvable:$true] %s236
          %242 = dma.hbm_to_vmem [thread:$0]  %s235, 2048, %s237, [#allocation6], 128, 128, 8
        $region24: #{tpu_custom_call.1} parent=11 // pred_fallthru
          _
        // Predicated region
        $region25: #{tpu_custom_call.1} parent=11 // pred_check
          %p243 = pneg %p129
        $region26: #{tpu_custom_call.1} parent=11 // pred_check_branch
          %245 = sbr.rel (%p243) target = $region28
        $region27: #{tpu_custom_call.1} parent=11 // pred_region
          _
        $region28: #{tpu_custom_call.1} parent=11 // pred_fallthru
          _
        // Predicated region
        $region29: #{tpu_custom_call.1} parent=11 // pred_check
          %p246 = pneg %p150
        $region30: #{tpu_custom_call.1} parent=11 // pred_check_branch
          %248 = sbr.rel (%p246) target = $region32
        $region31: #{tpu_custom_call.1} parent=11 // pred_region
          _
        $region32: #{tpu_custom_call.1} parent=11 // pred_fallthru
          _
        // Predicated region
        $region33: #{tpu_custom_call.1} parent=11 // pred_check
          %p249 = pneg %p171
        $region34: #{tpu_custom_call.1} parent=11 // pred_check_branch
          %251 = sbr.rel (%p249) target = $region36
        $region35: #{tpu_custom_call.1} parent=11 // pred_region
          _
        $region36: #{tpu_custom_call.1} parent=11 // pred_fallthru
          _
      $region12: #{tpu_custom_call.1} parent=5 // pred_fallthru
        _
      %p252 = scmp.lt.s32.totalorder %s19, 2
      // Predicated region
      $region37: #{tpu_custom_call.1} parent=5 // pred_check
        %p253 = pneg %p252
      $region38: #{tpu_custom_call.1} parent=5 // pred_check_branch
        %255 = sbr.rel (%p253) target = $region40
      $region39: #{tpu_custom_call.1} parent=5 // pred_region
        // Predicated region
        $region41: #{tpu_custom_call.1} parent=39 // pred_check
          %p256 = pneg %p39
        $region42: #{tpu_custom_call.1} parent=39 // pred_check_branch
          %258 = sbr.rel (%p256) target = $region44
        $region43: #{tpu_custom_call.1} parent=39 // pred_region
          %s259 = sand.u32 %s29, 1
          %s260 = scalar_lea.sflag [#allocation4], %s259
          %s261 = sand.u32 %s29, 1
          %s262 = smul.addr %s261, 16
          %s263 = scalar_lea.vmem [#allocation3], %s262
          %s264 = smul.u32 2, %s19
          %s265 = ssub.s32 3, %s264
          %p266 = scmp.lt.s32.totalorder %s265, 2
          %s267 = scalar_select %p266, %s265, 2
          %s268 = smul.u32 8, %s267
          %s269 = ssub.s32 16, %s268
          %s270 = sshll.u32 %s269, 4
          %271 = vsyncadd %s260, %s270
          %p272 = scmp.ne.s32.totalorder 0, %s268
          %s273 = smul.addr %s264, 8
          %s274 = scalar_lea.hbm %s0, %s273
          %s275 = smul.u32 8, %s267
          %s276 = sshll.u32 %s274, 4
          %s277 = int_to_ptr.hbm [resolvable:$true] %s276
          %s278 = sshll.u32 %s263, 4
          %s279 = int_to_ptr.vmem [resolvable:$true] %s278
          %s280 = sshll.u32 %s275, 4
          %284 = dma.hbm_to_vmem [thread:$0]  (%p272), %s277, %s280, %s279, %s260, 128, 128, 8
        $region44: #{tpu_custom_call.1} parent=39 // pred_fallthru
          _
      $region40: #{tpu_custom_call.1} parent=5 // pred_fallthru
        _
      %p285 = scmp.le.s32.totalorder 1, %s19
      %p286 = scmp.lt.s32.totalorder %s19, 3
      %p287 = pnand %p285, %p286
      %p288 = pneg %p287
      // Predicated region
      $region45: #{tpu_custom_call.1} parent=5 // pred_check
        _
      $region46: #{tpu_custom_call.1} parent=5 // pred_check_branch
        %290 = sbr.rel (%p287) target = $region48
      $region47: #{tpu_custom_call.1} parent=5 // pred_region
        %s291 = ssub.s32 %s19, 1
        %s292 = sand.u32 %s32, 1
        %s293 = scalar_lea.sflag [#allocation4], %s292
        %s294 = sand.u32 %s32, 1
        %s295 = smul.addr %s294, 16
        %s296 = scalar_lea.vmem [#allocation3], %s295
        // Predicated region
        $region49: #{tpu_custom_call.1} parent=47 // pred_check
          %p297 = pneg %p45
        $region50: #{tpu_custom_call.1} parent=47 // pred_check_branch
          %299 = sbr.rel (%p297) target = $region52
        $region51: #{tpu_custom_call.1} parent=47 // pred_region
          %301 = dma.done %s293, 256
        $region52: #{tpu_custom_call.1} parent=47 // pred_fallthru
          _
        // Predicated region
        $region53: #{tpu_custom_call.1} parent=47 // pred_check
          %p302 = pneg %p66
        $region54: #{tpu_custom_call.1} parent=47 // pred_check_branch
          %304 = sbr.rel (%p302) target = $region56
        $region55: #{tpu_custom_call.1} parent=47 // pred_region
          %306 = dma.done [#allocation6], 1280
        $region56: #{tpu_custom_call.1} parent=47 // pred_fallthru
          _
        // Predicated region
        $region57: #{tpu_custom_call.1} parent=47 // pred_check
          %p307 = pneg %p108
        $region58: #{tpu_custom_call.1} parent=47 // pred_check_branch
          %309 = sbr.rel (%p307) target = $region60
        $region59: #{tpu_custom_call.1} parent=47 // pred_region
          %311 = dma.done [#allocation6], 2048
        $region60: #{tpu_custom_call.1} parent=47 // pred_fallthru
          _
        %s312 = sand.u32 %s32, 1
        %s313 = scalar_lea.sflag [#allocation4], %s312
        %s314 = sand.u32 %s32, 1
        %s315 = smul.addr %s314, 16
        %s316 = scalar_lea.vmem [#allocation3], %s315
        %p317 = pneg %p45
        %p318 = pneg %p42
        %p319 = pneg %p66
        %p320 = pneg %p63
        %p321 = pneg %p87
        %p322 = pneg %p84
        %p323 = pneg %p108
        %p324 = pneg %p105
        %p325 = pneg %p129
        %p326 = pneg %p126
        %p327 = pneg %p150
        %p328 = pneg %p147
        %p329 = pneg %p171
        %p330 = pneg %p168
        %p331 = pneg %p197
        %p332 = pneg %p194
        %s333 = sand.u32 %s184, 1
        %s334 = sand.u32 %s184, 1
        %s335 = smul.addr %s334, 16
        %s336 = scalar_lea.vmem [#allocation8], %s335
        %s337 = smul.u32 2, %s24
        %s338 = ssub.s32 3, %s337
        %p339 = scmp.lt.s32.totalorder %s338, 2
        %s340 = scalar_select %p339, %s338, 2
        %s341 = smul.u32 8, %s340
        %s342 = smul.u32 2, %s24
        %s343 = ssub.s32 3, %s342
        %p344 = scmp.lt.s32.totalorder %s343, 2
        %s345 = scalar_select %p344, %s343, 2
        %s346 = smul.u32 8, %s345
        %v347 = vld [vmem:[%s296] sm:$0xff]
        %v348 = vld [vmem:[%s296 + $0x8] sm:$0xff]
        %v349 = vld [vmem:[#allocation5] sm:$0xff]
        %v350 = vld [vmem:[#allocation5 + $0x8] sm:$0xff]
        %v351 = vld [vmem:[#allocation5 + $0x10] sm:$0xff]
        %v352 = vld [vmem:[#allocation5 + $0x18] sm:$0xff]
        %v353 = vld [vmem:[#allocation5 + $0x20] sm:$0xff]
        %v354 = vld [vmem:[#allocation5 + $0x28] sm:$0xff]
        %v355 = vld [vmem:[#allocation5 + $0x30] sm:$0xff]
        %v356 = vld [vmem:[#allocation5 + $0x38] sm:$0xff]
        %v357 = vld [vmem:[#allocation5 + $0x40] sm:$0xff]
        %v358 = vld [vmem:[#allocation5 + $0x48] sm:$0xff]
        %vm359 = vcmask 326656
        %v361 = vsel %vm359, %v347, 0
        %v364 = vsel %vm359, %v348, 0
        %366 = vmatpush.msra.mxu0 0.0
        %367 = vmatpush.msra.mxu0 0.0
        %368 = vmatpush.msra.mxu0 0.0
        %369 = vmatpush.msra.mxu0 0.0
        %370 = vmatpush.msra.mxu0 0.0
        %371 = vmatpush.msra.mxu0 0.0
        %372 = vmatpush.msra.mxu0 0.0
        %373 = vmatpush.msra.mxu0 0.0
        %374 = vmatpush.msra.mxu0 0.0
        %375 = vmatpush.msra.mxu0 0.0
        %376 = vmatpush.msra.mxu0 0.0
        %377 = vmatpush.msra.mxu0 %v357
        %378 = vmatpush.msra.mxu0 %v355
        %379 = vmatpush.msra.mxu0 %v353
        %380 = vmatpush.msra.mxu0 %v351
        %381 = vmatpush.msra.mxu0 %v349
        %382 = vmatmul.f32.gmra.mxu0 %v361
        %v383 = vpop.f32.mrf.mxu0
        %v384 = vadd.f32 0.0, %v383
        %385 = vmatmul.f32.gmra.mxu0 %v364
        %v386 = vpop.f32.mrf.mxu0
        %v387 = vadd.f32 0.0, %v386
        %388 = vdwg.mxu0
        %389 = vmatpush.msra.mxu0 0.0
        %390 = vmatpush.msra.mxu0 0.0
        %391 = vmatpush.msra.mxu0 0.0
        %392 = vmatpush.msra.mxu0 0.0
        %393 = vmatpush.msra.mxu0 0.0
        %394 = vmatpush.msra.mxu0 0.0
        %395 = vmatpush.msra.mxu0 0.0
        %396 = vmatpush.msra.mxu0 0.0
        %397 = vmatpush.msra.mxu0 0.0
        %398 = vmatpush.msra.mxu0 0.0
        %399 = vmatpush.msra.mxu0 0.0
        %400 = vmatpush.msra.mxu0 %v358
        %401 = vmatpush.msra.mxu0 %v356
        %402 = vmatpush.msra.mxu0 %v354
        %403 = vmatpush.msra.mxu0 %v352
        %404 = vmatpush.msra.mxu0 %v350
        %405 = vmatmul.f32.gmra.mxu0 %v361
        %v406 = vpop.f32.mrf.mxu0
        %v407 = vadd.f32 0.0, %v406
        %408 = vmatmul.f32.gmra.mxu0 %v364
        %v409 = vpop.f32.mrf.mxu0
        %v410 = vadd.f32 0.0, %v409
        %411 = vdwg.mxu0
        %v412 = vld [vmem:[%s2] sm:$0x1]
        %v414 = vperm.slane %v412, 0
        %v416 = vadd.f32 %v384, %v414
        %v417 = vadd.f32 %v387, %v414
        %v418 = vmax.f32 %v416, 0.0
        %v419 = vmax.f32 %v417, 0.0
        %v420 = vld [vmem:[#allocation7] sm:$0xff]
        %v421 = vld [vmem:[#allocation7 + $0x8] sm:$0xff]
        %v422 = vld [vmem:[#allocation7 + $0x10] sm:$0xff]
        %v423 = vld [vmem:[#allocation7 + $0x18] sm:$0xff]
        %v424 = vld [vmem:[#allocation7 + $0x20] sm:$0xff]
        %v425 = vld [vmem:[#allocation7 + $0x28] sm:$0xff]
        %v426 = vld [vmem:[#allocation7 + $0x30] sm:$0xff]
        %v427 = vld [vmem:[#allocation7 + $0x38] sm:$0xff]
        %v428 = vld [vmem:[#allocation7 + $0x40] sm:$0xff]
        %v429 = vld [vmem:[#allocation7 + $0x48] sm:$0xff]
        %v430 = vld [vmem:[#allocation7 + $0x50] sm:$0xff]
        %v431 = vld [vmem:[#allocation7 + $0x58] sm:$0xff]
        %v432 = vld [vmem:[#allocation7 + $0x60] sm:$0xff]
        %v433 = vld [vmem:[#allocation7 + $0x68] sm:$0xff]
        %v434 = vld [vmem:[#allocation7 + $0x70] sm:$0xff]
        %v435 = vld [vmem:[#allocation7 + $0x78] sm:$0xff]
        %436 = vmatpush.msra.mxu0 %v435
        %437 = vmatpush.msra.mxu0 %v434
        %438 = vmatpush.msra.mxu0 %v433
        %439 = vmatpush.msra.mxu0 %v432
        %440 = vmatpush.msra.mxu0 %v431
        %441 = vmatpush.msra.mxu0 %v430
        %442 = vmatpush.msra.mxu0 %v429
        %443 = vmatpush.msra.mxu0 %v428
        %444 = vmatpush.msra.mxu0 %v427
        %445 = vmatpush.msra.mxu0 %v426
        %446 = vmatpush.msra.mxu0 %v425
        %447 = vmatpush.msra.mxu0 %v424
        %448 = vmatpush.msra.mxu0 %v423
        %449 = vmatpush.msra.mxu0 %v422
        %450 = vmatpush.msra.mxu0 %v421
        %451 = vmatpush.msra.mxu0 %v420
        %452 = vmatmul.f32.gmra.mxu0 %v418
        %v453 = vpop.f32.mrf.mxu0
        %v454 = vadd.f32 %v407, %v453
        %455 = vmatmul.f32.gmra.mxu0 %v419
        %v456 = vpop.f32.mrf.mxu0
        %v457 = vadd.f32 %v410, %v456
        %458 = vdwg.mxu0
        %v459 = vld [vmem:[%s4] sm:$0x1]
        %v461 = vperm.slane %v459, 0
        %v463 = vadd.f32 %v454, %v461
        %v464 = vadd.f32 %v457, %v461
        %v465 = vmax.f32 %v463, 0.0
        %v466 = vmax.f32 %v464, 0.0
        %v467 = vld [vmem:[%s5] sm:$0x1]
        %v469 = vperm.slane %v467, 0
        %v471 = vmul.f32 %v465, %v469
        %v472 = vmul.f32 %v466, %v469
        %473 = vadd.xlane.f32.xlu0 %v471
        %v474 = vpop.xlane.xlu0 %473
        %475 = vadd.xlane.f32.xlu0 %v472
        %v476 = vpop.xlane.xlu0 %475
        %v477 = vld [vmem:[#allocation2] sm:$0x1]
        %v479 = vperm.slane %v477, 0
        %v481 = vadd.f32 %v474, %v479
        %v482 = vadd.f32 %v476, %v479
        %vm483 = vcmask 7168
        %484 = vst.msk [vmem:[%s336] sm:$0xff] %vm483, %v481
        %485 = vst.msk [vmem:[%s336 + $0x8] sm:$0xff] %vm483, %v482
        %s486 = sand.u32 %s184, 1
        %s487 = sand.u32 %s184, 1
        %s488 = smul.addr %s487, 16
        %s489 = scalar_lea.vmem [#allocation8], %s488
        // Predicated region
        $region61: #{tpu_custom_call.1} parent=47 // pred_check
          %p490 = pneg %p194
        $region62: #{tpu_custom_call.1} parent=47 // pred_check_branch
          %492 = sbr.rel (%p490) target = $region64
        $region63: #{tpu_custom_call.1} parent=47 // pred_region
          %s493 = smul.u32 2, %s24
          %s494 = ssub.s32 3, %s493
          %p495 = scmp.lt.s32.totalorder %s494, 2
          %s496 = scalar_select %p495, %s494, 2
          %s497 = smul.u32 8, %s496
          %p498 = scmp.ne.s32.totalorder 0, %s497
          %s499 = smul.addr %s493, 8
          %s500 = scalar_lea.vmem %s7, %s499
          // Predicated region
          $region65: #{tpu_custom_call.1} parent=63 // pred_check
            %p501 = pneg %p498
          $region66: #{tpu_custom_call.1} parent=63 // pred_check_branch
            %503 = sbr.rel (%p501) target = $region68
          $region67: #{tpu_custom_call.1} parent=63 // pred_region
            // Predicated region
            $region69: #{tpu_custom_call.1} parent=67 // pred_check
              _
            $region70: #{tpu_custom_call.1} parent=67 // pred_check_branch
              %505 = sbr.rel (0) target = $region72
            $region71: #{tpu_custom_call.1} parent=67 // pred_region
              // Predicated region
              $region91: #{tpu_custom_call.1} parent=71 // pred_check
                _
              $region92: #{tpu_custom_call.1} parent=71 // pred_check_branch
                %557 = sbr.rel (0) target = $region94
              $region93: #{tpu_custom_call.1} parent=71 // pred_region
                %s558 = sshrl.u32 %s496, 1
                // While loop
                $region95: #{tpu_custom_call.1} parent=93 // loop_pre_header
                  _
                $region96: #{tpu_custom_call.1} parent=93 // loop_header
                  %s560 = sphi 0, %s562
                  %p561 = scmp.ge.s32.totalorder %s560, %s558
                  %s565 = sphi 0, %s574
                  %s566 = sphi %s489, %s577
                  %s567 = sphi %s500, %s578
                $region97: #{tpu_custom_call.1} parent=93 // loop_header_branch
                  %564 = sbr.rel (%p561) target = $region101
                $region98: #{tpu_custom_call.1} parent=93 // loop_body
                  %v568 = vld [vmem:[%s566] sm:$0xff]
                  %569 = vst [vmem:[%s567] sm:$0xff] %v568
                  %v570 = vld [vmem:[%s566 + $0x8] sm:$0xff]
                  %571 = vst [vmem:[%s567 + $0x8] sm:$0xff] %v570
                  %s572 = sadd.s32 1, %s565
                  %p573 = scmp.ge.s32.totalorder %s572, %s558
                  %s574 = scalar_select %p573, 0, %s572
                  %s575 = smul.u32 %s574, 16
                  %s576 = smul.u32 %s574, 16
                  %s577 = scalar_lea.vmem %s489, %s575 [#allocation8]
                  %s578 = scalar_lea.vmem %s500, %s576
                $region99: #{tpu_custom_call.1} parent=93 // loop_footer
                  %s562 = sadd.s32 %s560, 1
                $region100: #{tpu_custom_call.1} parent=93 // loop_footer_branch
                  %559 = sbr.rel target = $region96
                $region101: #{tpu_custom_call.1} parent=93 // loop_exit
                  _
                %s579 = sshrl.u32 %s496, 1
                %s580 = sand.u32 %s496, 1
                %s581 = smul.u32 %s579, 2
                %s582 = smul.u32 8, %s581
                %s583 = scalar_lea.vmem %s489, %s582 [#allocation8]
                %s584 = smul.u32 8, %s581
                %s585 = scalar_lea.vmem %s500, %s584
                // While loop
                $region102: #{tpu_custom_call.1} parent=93 // loop_pre_header
                  _
                $region103: #{tpu_custom_call.1} parent=93 // loop_header
                  %s587 = sphi 0, %s589
                  %p588 = scmp.ge.s32.totalorder %s587, %s580
                  %s592 = sphi 0, %s599
                  %s593 = sphi %s583, %s602
                  %s594 = sphi %s585, %s603
                $region104: #{tpu_custom_call.1} parent=93 // loop_header_branch
                  %591 = sbr.rel (%p588) target = $region108
                $region105: #{tpu_custom_call.1} parent=93 // loop_body
                  %v595 = vld [vmem:[%s593] sm:$0xff]
                  %596 = vst [vmem:[%s594] sm:$0xff] %v595
                  %s597 = sadd.s32 1, %s592
                  %p598 = scmp.ge.s32.totalorder %s597, %s580
                  %s599 = scalar_select %p598, 0, %s597
                  %s600 = smul.u32 %s599, 8
                  %s601 = smul.u32 %s599, 8
                  %s602 = scalar_lea.vmem %s583, %s600 [#allocation8]
                  %s603 = scalar_lea.vmem %s585, %s601
                $region106: #{tpu_custom_call.1} parent=93 // loop_footer
                  %s589 = sadd.s32 %s587, 1
                $region107: #{tpu_custom_call.1} parent=93 // loop_footer_branch
                  %586 = sbr.rel target = $region103
                $region108: #{tpu_custom_call.1} parent=93 // loop_exit
                  _
              $region94: #{tpu_custom_call.1} parent=71 // pred_fallthru
                _
              // Predicated region
              $region109: #{tpu_custom_call.1} parent=71 // pred_check
                _
              $region110: #{tpu_custom_call.1} parent=71 // pred_check_branch
                %605 = sbr.rel target = $region112
              $region111: #{tpu_custom_call.1} parent=71 // pred_region
                _
              $region112: #{tpu_custom_call.1} parent=71 // pred_fallthru
                _
            $region72: #{tpu_custom_call.1} parent=67 // pred_fallthru
              _
            // Predicated region
            $region73: #{tpu_custom_call.1} parent=67 // pred_check
              _
            $region74: #{tpu_custom_call.1} parent=67 // pred_check_branch
              %507 = sbr.rel target = $region76
            $region75: #{tpu_custom_call.1} parent=67 // pred_region
              %s509 = ssub.s32 256, 1
              %s510 = sshrl.u32 %s496, 1
              // While loop
              $region77: #{tpu_custom_call.1} parent=75 // loop_pre_header
                _
              $region78: #{tpu_custom_call.1} parent=75 // loop_header
                %s512 = sphi 0, %s514
                %p513 = scmp.ge.s32.totalorder %s512, %s510
                %s517 = sphi 0, %s526
                %s518 = sphi %s489, %s529
                %s519 = sphi %s500, %s530
              $region79: #{tpu_custom_call.1} parent=75 // loop_header_branch
                %516 = sbr.rel (%p513) target = $region83
              $region80: #{tpu_custom_call.1} parent=75 // loop_body
                %v520 = vld [vmem:[%s518] sm:%s509]
                %521 = vst [vmem:[%s519] sm:%s509] %v520
                %v522 = vld [vmem:[%s518 + $0x8] sm:%s509]
                %523 = vst [vmem:[%s519 + $0x8] sm:%s509] %v522
                %s524 = sadd.s32 1, %s517
                %p525 = scmp.ge.s32.totalorder %s524, %s510
                %s526 = scalar_select %p525, 0, %s524
                %s527 = smul.u32 %s526, 16
                %s528 = smul.u32 %s526, 16
                %s529 = scalar_lea.vmem %s489, %s527 [#allocation8]
                %s530 = scalar_lea.vmem %s500, %s528
              $region81: #{tpu_custom_call.1} parent=75 // loop_footer
                %s514 = sadd.s32 %s512, 1
              $region82: #{tpu_custom_call.1} parent=75 // loop_footer_branch
                %511 = sbr.rel target = $region78
              $region83: #{tpu_custom_call.1} parent=75 // loop_exit
                _
              %s531 = sshrl.u32 %s496, 1
              %s532 = sand.u32 %s496, 1
              %s533 = smul.u32 %s531, 2
              %s534 = smul.u32 8, %s533
              %s535 = scalar_lea.vmem %s489, %s534 [#allocation8]
              %s536 = smul.u32 8, %s533
              %s537 = scalar_lea.vmem %s500, %s536
              // While loop
              $region84: #{tpu_custom_call.1} parent=75 // loop_pre_header
                _
              $region85: #{tpu_custom_call.1} parent=75 // loop_header
                %s539 = sphi 0, %s541
                %p540 = scmp.ge.s32.totalorder %s539, %s532
                %s544 = sphi 0, %s551
                %s545 = sphi %s535, %s554
                %s546 = sphi %s537, %s555
              $region86: #{tpu_custom_call.1} parent=75 // loop_header_branch
                %543 = sbr.rel (%p540) target = $region90
              $region87: #{tpu_custom_call.1} parent=75 // loop_body
                %v547 = vld [vmem:[%s545] sm:%s509]
                %548 = vst [vmem:[%s546] sm:%s509] %v547
                %s549 = sadd.s32 1, %s544
                %p550 = scmp.ge.s32.totalorder %s549, %s532
                %s551 = scalar_select %p550, 0, %s549
                %s552 = smul.u32 %s551, 8
                %s553 = smul.u32 %s551, 8
                %s554 = scalar_lea.vmem %s535, %s552 [#allocation8]
                %s555 = scalar_lea.vmem %s537, %s553
              $region88: #{tpu_custom_call.1} parent=75 // loop_footer
                %s541 = sadd.s32 %s539, 1
              $region89: #{tpu_custom_call.1} parent=75 // loop_footer_branch
                %538 = sbr.rel target = $region85
              $region90: #{tpu_custom_call.1} parent=75 // loop_exit
                _
            $region76: #{tpu_custom_call.1} parent=67 // pred_fallthru
              _
          $region68: #{tpu_custom_call.1} parent=63 // pred_fallthru
            _
          %606 = vnop
        $region64: #{tpu_custom_call.1} parent=47 // pred_fallthru
          _
      $region48: #{tpu_custom_call.1} parent=5 // pred_fallthru
        _
      %p607 = scmp.le.s32.totalorder 2, %s19
      // Predicated region
      $region113: #{tpu_custom_call.1} parent=5 // pred_check
        %p608 = pneg %p607
      $region114: #{tpu_custom_call.1} parent=5 // pred_check_branch
        %610 = sbr.rel (%p608) target = $region116
      $region115: #{tpu_custom_call.1} parent=5 // pred_region
        %s611 = ssub.s32 %s19, 2
        // Predicated region
        $region117: #{tpu_custom_call.1} parent=115 // pred_check
          %p612 = pneg %p200
        $region118: #{tpu_custom_call.1} parent=115 // pred_check_branch
          %614 = sbr.rel (%p612) target = $region120
        $region119: #{tpu_custom_call.1} parent=115 // pred_region
          %s615 = sand.u32 %s185, 1
          %s616 = sand.u32 %s185, 1
          %s617 = smul.addr %s616, 16
          %s618 = scalar_lea.vmem [#allocation8], %s617
        $region120: #{tpu_custom_call.1} parent=115 // pred_fallthru
          _
      $region116: #{tpu_custom_call.1} parent=5 // pred_fallthru
        _
    $region6: #{tpu_custom_call.1} parent=1 // loop_footer
      %s23 = sadd.s32 1, %s19
    $region7: #{tpu_custom_call.1} parent=1 // loop_footer_branch
      %18 = sbr.rel target = $region3
    $region8: #{tpu_custom_call.1} parent=1 // loop_exit
      _
    %619 = vsyncpa [#allocation4], 1
    %s620 = scalar_lea.sflag [#allocation4], 1
    %621 = vsyncpa %s620, 1
    %622 = vsyncpa [#allocation6], 1

</llo_original>
